<compile_context>
chip_gen: v6e
topology: v6e:2x2x1
jax: 0.10.0
libtpu: 0.0.40
codegen_flags: <defaults>
</compile_context>

<pallas_src>
import functools

import jax
import jax.numpy as jnp
from jax.experimental import pallas as pl
from jax.experimental.pallas import tpu as pltpu


TB = 8  # timesteps per grid step (sublane-aligned)


# ---------------------------------------------------------------------------
# Kernels
# ---------------------------------------------------------------------------
def _input_proj_kernel(x_ref, w_ref, b_ref, o_ref):
    """gi_all = Emb[tokens] @ W_ih^T + b_ih as one bulk M=T MXU matmul."""
    o_ref[...] = (
        jnp.dot(x_ref[...], w_ref[...], preferred_element_type=jnp.float32)
        + b_ref[...]
    )


def _gru_recurrent_kernel(gi_ref,     # (TB, 3*Hp) f32  precomputed input proj (incl. b_ih)
                          h0_ref,     # (1, Hp)    f32  initial hidden (resident)
                          whh_ref,    # (Hp, 3*Hp) f32  W_hh^T, gate-blocked (resident)
                          bhh_ref,    # (1, 3*Hp)  f32  (resident)
                          out_ref,    # (TB, Hp)   bf16 per-step hidden outputs
                          hfin_ref,   # (1, Hp)    f32  final hidden
                          h_scratch,  # VMEM (1, Hp) f32 hidden carry
                          *, valid_len):
    Hp = h0_ref.shape[-1]
    tb = gi_ref.shape[0]
    blk = pl.program_id(0)

    @pl.when(blk == 0)
    def _():
        h_scratch[...] = h0_ref[...]

    h = h_scratch[...]                                   # (1, Hp) f32
    hs = []
    for t in range(tb):                                  # fully unrolled, static slices
        # Only h @ W_hh^T remains on the serial critical path (f32 LHS & weights).
        gh = jnp.dot(h, whh_ref[...],
                     preferred_element_type=jnp.float32) + bhh_ref[...]   # (1, 3*Hp)
        gi_t = gi_ref[t:t + 1, :]                        # (1, 3*Hp) f32 static row view
        r = jax.nn.sigmoid(gi_t[:, 0:Hp] + gh[:, 0:Hp])
        z = jax.nn.sigmoid(gi_t[:, Hp:2 * Hp] + gh[:, Hp:2 * Hp])
        n = jnp.tanh(gi_t[:, 2 * Hp:3 * Hp] + r * gh[:, 2 * Hp:3 * Hp])
        new_h = (1.0 - z) * n + z * h
        # Mask padded tail steps (global t >= valid_len) so h / hfin stay exact.
        keep = (blk * tb + t < valid_len).astype(jnp.float32)
        h = keep * new_h + (1.0 - keep) * h
        hs.append(h)

    h_scratch[...] = h
    hfin_ref[...] = h
    out_ref[...] = jnp.concatenate(hs, axis=0).astype(out_ref.dtype)   # (TB, Hp)


# ---------------------------------------------------------------------------
# Parameter prep (lane-dense gate-blocked padding)
# ---------------------------------------------------------------------------
def _round_up(x, m):
    return (x + m - 1) // m * m


def _pad_gates(wT, H, Hp, dtype):
    """(H, 3H) -> (Hp, 3*Hp): each gate in its own Hp-wide, 128-aligned block."""
    out = jnp.zeros((Hp, 3 * Hp), dtype)
    for g in range(3):
        out = out.at[:H, g * Hp:g * Hp + H].set(wT[:, g * H:(g + 1) * H].astype(dtype))
    return out


def _pad_bias(b, H, Hp):
    out = jnp.zeros((1, 3 * Hp), jnp.float32)
    for g in range(3):
        out = out.at[0, g * Hp:g * Hp + H].set(b[g * H:(g + 1) * H])
    return out


def init_params(key, input_size, hidden_size):
    """Deterministic synthetic init matching nn.Embedding + nn.GRU shapes (f32 master)."""
    k_emb, k_wih, k_whh, k_bih, k_bhh = jax.random.split(key, 5)
    H = hidden_size
    bound = 1.0 / jnp.sqrt(H)
    emb = jax.random.normal(k_emb, (input_size, H), jnp.float32)
    w_ih = jax.random.uniform(k_wih, (3 * H, H), jnp.float32, -bound, bound)
    w_hh = jax.random.uniform(k_whh, (3 * H, H), jnp.float32, -bound, bound)
    b_ih = jax.random.uniform(k_bih, (3 * H,), jnp.float32, -bound, bound)
    b_hh = jax.random.uniform(k_bhh, (3 * H,), jnp.float32, -bound, bound)
    return {
        "embedding": emb,            # (V, H)
        "wihT": w_ih.T,              # (H, 3H)
        "whhT": w_hh.T,              # (H, 3H)
        "bih": b_ih.reshape(1, 3 * H),
        "bhh": b_hh.reshape(1, 3 * H),
    }


def prepare_kernel_params(params):
    """Pad to lane-dense Hp layout; Emb/W_ih bf16 (bulk path), W_hh f32 (serial path)."""
    emb = params["embedding"]
    V, H = emb.shape
    # For H > 128, align the contraction dim to 256 so the v6e/v7x 2x256x256 MXU
    # is fully fed; 128 alignment is enough below that (and on v5e).
    Hp = 128 if H <= 128 else _round_up(H, 256)

    emb_p = jnp.zeros((V, Hp), jnp.bfloat16).at[:, :H].set(emb.astype(jnp.bfloat16))
    wih_cat = _pad_gates(params["wihT"], H, Hp, jnp.bfloat16)   # (Hp, 3Hp) bf16
    whh_cat = _pad_gates(params["whhT"], H, Hp, jnp.float32)    # (Hp, 3Hp) f32
    bih = _pad_bias(params["bih"].reshape(-1), H, Hp)           # (1, 3Hp) f32
    bhh = _pad_bias(params["bhh"].reshape(-1), H, Hp)

    return {"emb": emb_p, "wih": wih_cat, "whh": whh_cat, "bih": bih, "bhh": bhh,
            "H": H, "Hp": Hp, "V": V}


# ---------------------------------------------------------------------------
# Wrappers
# ---------------------------------------------------------------------------
def encoder_rnn_forward_seq(tokens, hidden, kparams):
    """Run the encoder GRU over a whole token sequence.

    tokens: int32[T]; hidden: f32 (1,1,H).
    Returns (outputs (T,1,H) f32, final hidden (1,1,H) f32) -- identical to
    calling the PyTorch EncoderRNN.forward T times, threading the hidden state.
    """
    H, Hp = kparams["H"], kparams["Hp"]
    T = int(tokens.shape[0])
    Tp = _round_up(max(T, 1), TB)
    nblk = Tp // TB

    tokens_p = jnp.zeros((Tp,), jnp.int32).at[:T].set(tokens.astype(jnp.int32))

    # Bulk embedding gather: one XLA gather instead of T tiny per-step DMAs.
    x = jnp.take(kparams["emb"], tokens_p, axis=0)              # (Tp, Hp) bf16

    # Phase 1: dense input projection for all timesteps (off the serial chain).
    # TODO(synk): tile the T axis of this projection for very long sequences.
    gi = pl.pallas_call(
        _input_proj_kernel,
        out_shape=jax.ShapeDtypeStruct((Tp, 3 * Hp), jnp.float32),
    )(x, kparams["wih"], kparams["bih"])

    h0 = jnp.zeros((1, Hp), jnp.float32).at[:, :H].set(
        hidden.reshape(1, H).astype(jnp.float32))

    # Phase 2: recurrence, TB timesteps per grid step, weights resident in VMEM.
    grid_spec = pltpu.PrefetchScalarGridSpec(
        num_scalar_prefetch=0,
        grid=(nblk,),
        in_specs=[
            pl.BlockSpec((TB, 3 * Hp), lambda b: (b, 0)),       # gi block
            pl.BlockSpec((1, Hp), lambda b: (0, 0)),            # h0 (resident)
            pl.BlockSpec((Hp, 3 * Hp), lambda b: (0, 0)),       # W_hh^T (resident)
            pl.BlockSpec((1, 3 * Hp), lambda b: (0, 0)),        # b_hh (resident)
        ],
        out_specs=[
            pl.BlockSpec((TB, Hp), lambda b: (b, 0)),           # per-step outputs (bf16)
            pl.BlockSpec((1, Hp), lambda b: (0, 0)),            # final hidden (f32)
        ],
        scratch_shapes=[pltpu.VMEM((1, Hp), jnp.float32)],      # hidden carry
    )

    cost = pl.CostEstimate(
        flops=int(Tp * 2 * Hp * 3 * Hp),
        transcendentals=int(Tp * 3 * Hp),
        bytes_accessed=int(Tp * 3 * Hp * 4 + Hp * 3 * Hp * 4 + 3 * Hp * 4
                           + Hp * 4 + Tp * Hp * 2 + Hp * 4),
    )

    # TODO(synk): for large H on v7x, single-buffer the resident W_hh spec
    # (pipeline_mode=pl.Buffered(1)) and set vmem_limit_bytes so 12*Hp^2 bytes
    # fits 64 MiB VMEM; and add a leading 'parallel' batch grid axis when
    # processing multiple sequences so both TensorCores are occupied.
    outs, hfin = pl.pallas_call(
        functools.partial(_gru_recurrent_kernel, valid_len=T),
        out_shape=(jax.ShapeDtypeStruct((Tp, Hp), jnp.bfloat16),
                   jax.ShapeDtypeStruct((1, Hp), jnp.float32)),
        grid_spec=grid_spec,
        compiler_params=pltpu.CompilerParams(
            dimension_semantics=("arbitrary",)),   # sequential time dependence
        cost_estimate=cost,
    )(gi, h0, kparams["whh"], kparams["bhh"])

    outputs = outs[:T, :H].astype(jnp.float32).reshape(T, 1, H)
    hidden_out = hfin[:, :H].reshape(1, 1, H)
    return outputs, hidden_out


def encoder_rnn_forward(tok, hidden, kparams):
    """Exact equivalent of EncoderRNN.forward(inp, hidden) for a single token."""
    tok = tok.reshape(1).astype(jnp.int32)
    outputs, hidden_out = encoder_rnn_forward_seq(tok, hidden, kparams)
    H = kparams["H"]
    return outputs.reshape(1, 1, H), hidden_out


# ---------------------------------------------------------------------------
# Pure-JAX reference (PyTorch GRU-cell semantics; Emb/W_ih bf16-rounded and
# W_hh / hidden kept f32 to match the kernel's numerics)
# ---------------------------------------------------------------------------
def _reference_forward_seq(tokens, hidden, params):
    H = params["wihT"].shape[0]
    emb = params["embedding"].astype(jnp.bfloat16).astype(jnp.float32)
    wihT = params["wihT"].astype(jnp.bfloat16).astype(jnp.float32)
    whhT = params["whhT"]
    bih, bhh = params["bih"], params["bhh"]
    h = hidden.reshape(1, H).astype(jnp.float32)
    outs = []
    for t in range(tokens.shape[0]):
        x = emb[tokens[t]].reshape(1, H)
        gi = x @ wihT + bih
        gh = h @ whhT + bhh
        i_r, i_z, i_n = gi[:, :H], gi[:, H:2 * H], gi[:, 2 * H:]
        h_r, h_z, h_n = gh[:, :H], gh[:, H:2 * H], gh[:, 2 * H:]
        r = jax.nn.sigmoid(i_r + h_r)
        z = jax.nn.sigmoid(i_z + h_z)
        n = jnp.tanh(i_n + r * h_n)
        h = (1.0 - z) * n + z * h
        outs.append(h)
    return jnp.stack(outs, axis=0), h.reshape(1, 1, H)


# ---------------------------------------------------------------------------
if __name__ == "__main__":
    input_size = 16      # vocab size
    hidden_size = 32
    seq_len = 8

    key = jax.random.PRNGKey(0)
    k_params, k_tok = jax.random.split(key)
    params = init_params(k_params, input_size, hidden_size)
    kparams = prepare_kernel_params(params)

    tokens = jax.random.randint(k_tok, (seq_len,), 0, input_size, dtype=jnp.int32)
    hidden0 = jnp.zeros((1, 1, hidden_size), jnp.float32)   # initHidden()

    # --- single-step forward (exact module semantics) ---
    out1, h1 = encoder_rnn_forward(tokens[:1], hidden0, kparams)
    out1 = jax.block_until_ready(out1)
    h1 = jax.block_until_ready(h1)
    ref_out1_seq, ref_h1 = _reference_forward_seq(tokens[:1], hidden0, params)
    ref_out1 = ref_out1_seq.reshape(1, 1, hidden_size)
    assert out1.shape == (1, 1, hidden_size)
    assert h1.shape == (1, 1, hidden_size)
    assert jnp.allclose(out1, ref_out1, atol=2e-2), "single-step output mismatch"
    assert jnp.allclose(h1, ref_h1, atol=2e-2), "single-step hidden mismatch"

    # --- full-sequence forward (blocked-time recurrence, weights resident) ---
    outs, hT = encoder_rnn_forward_seq(tokens, hidden0, kparams)
    outs = jax.block_until_ready(outs)
    hT = jax.block_until_ready(hT)
    ref_outs, ref_hT = _reference_forward_seq(tokens, hidden0, params)
    assert outs.shape == (seq_len, 1, hidden_size)
    assert hT.shape == (1, 1, hidden_size)
    assert jnp.allclose(outs, ref_outs, atol=2e-2), "sequence outputs mismatch"
    assert jnp.allclose(hT, ref_hT, atol=2e-2), "final hidden mismatch"

    print("KERNEL_OK")
</pallas_src>

<mosaic_0001>
module attributes {stable_mosaic.version = 11 : i64} {
  func.func @_input_proj_kernel(%arg0: memref<8x128xbf16, #tpu.memory_space<vmem>>, %arg1: memref<128x384xbf16, #tpu.memory_space<vmem>>, %arg2: memref<1x384xf32, #tpu.memory_space<vmem>>, %arg3: memref<8x384xf32, #tpu.memory_space<vmem>>) attributes {dimension_semantics = [], scalar_prefetch = 0 : i64, scratch_operands = 0 : i64, tpu.core_type = #tpu.core_type<tc>} {
    %c0 = arith.constant 0 : index
    %c0_0 = arith.constant 0 : index
    %0 = vector.load %arg0[%c0, %c0_0] : memref<8x128xbf16, #tpu.memory_space<vmem>>, vector<8x128xbf16>
    %c0_1 = arith.constant 0 : index
    %c0_2 = arith.constant 0 : index
    %1 = vector.load %arg1[%c0_1, %c0_2] : memref<128x384xbf16, #tpu.memory_space<vmem>>, vector<128x384xbf16>
    %cst = arith.constant dense<0.000000e+00> : vector<8x384xf32>
    %2 = tpu.matmul %0, %1, %cst {dimension_numbers = #tpu.dot_dimension_numbers<[1], [0], [0], [1], [0, 0, 1, 1], [], []>} : vector<8x128xbf16>, vector<128x384xbf16>, vector<8x384xf32> -> vector<8x384xf32>
    %c0_3 = arith.constant 0 : index
    %c0_4 = arith.constant 0 : index
    %3 = vector.load %arg2[%c0_3, %c0_4] : memref<1x384xf32, #tpu.memory_space<vmem>>, vector<1x384xf32>
    %4 = vector.broadcast %3 : vector<1x384xf32> to vector<8x384xf32>
    %5 = arith.addf %2, %4 : vector<8x384xf32>
    %c0_5 = arith.constant 0 : index
    %c0_6 = arith.constant 0 : index
    %6 = vector.load %arg3[%c0_5, %c0_6] : memref<8x384xf32, #tpu.memory_space<vmem>>, vector<8x384xf32>
    tpu.vector_store %arg3[%c0_5, %c0_6], %5 {strides = array<i32>} : memref<8x384xf32, #tpu.memory_space<vmem>>, vector<8x384xf32>,
    return
  }
}

</mosaic_0001>

<llo_original>
// kernel: tpu_custom_call.1
$region0: #{tpu_custom_call.1}
  #allocation0 [shape = 'u32[]', space=smem, size = 0x4, offset = 0x4, fixed_abs, tag = 'smem constant byte address 0x4 - core index']
  #allocation1 [shape = 'u32[144,128]{1,0:T(1,128)}', space=vmem, size = 0x12000, scoped, tag = 'internal scratch']
  %s0 = inlined_call_operand.hbm [shape: bf16[8,128], index: 0, kind: input, shape index: {}]
  %s1 = inlined_call_operand.hbm [shape: bf16[128,384], index: 1, kind: input, shape index: {}]
  %s2 = inlined_call_operand.vmem [shape: f32[1,384], index: 2, kind: input, shape index: {}]
  %s3 = inlined_call_operand.hbm [shape: f32[8,384], index: 3, kind: output, shape index: {}]
  %s4 = sld [smem:[#allocation0]]
  $region30: #{tpu_custom_call.1} parent=0
    _
  %s6 = ssub.s32 1, %s4
  %s7 = scalar_select 0, %s6, %s4
  $region1: #{tpu_custom_call.1} parent=0
    #allocation2 [shape = 'u8[2048]{0}', space=vmem, size = 0x800, scoped, tag = 'input window, operand 0, single buffered']
    #allocation3 [shape = 's32[1]{0}', space=sflag, size = 0x4, scoped, tag = 'scoped memory for tpu_custom_call.1']
    #allocation4 [shape = 's32[1]{0}', space=sflag, size = 0x4, scoped, tag = 'scoped memory for tpu_custom_call.1']
    #allocation5 [shape = 'u8[98304]{0}', space=vmem, size = 0x18000, scoped, tag = 'input window, operand 1, single buffered']
    #allocation6 [shape = 's32[1]{0}', space=sflag, size = 0x4, scoped, tag = 'scoped memory for tpu_custom_call.1']
    #allocation7 [shape = 'u8[12288]{0}', space=vmem, size = 0x3000, scoped, tag = 'output window, operand 0, single buffered']
    %8 = vsyncpa [#allocation3], 0
    %9 = vsyncpa [#allocation6], 0
    %10 = vsyncpa [#allocation4], 0
    // Predicated region
    $region2: #{tpu_custom_call.1} parent=1 // pred_check
      _
    $region3: #{tpu_custom_call.1} parent=1 // pred_check_branch
      %12 = sbr.rel (0) target = $region5
    $region4: #{tpu_custom_call.1} parent=1 // pred_region
      %s14 = ssub.s32 64, 64
      %15 = vsyncadd [#allocation3], %s14
      %s17 = sshll.u32 [#allocation2], 4
      %s18 = int_to_ptr.vmem [resolvable:$true] %s17
      %20 = dma.hbm_to_vmem [thread:$0]  %s0, 64, %s18, [#allocation3]
    $region5: #{tpu_custom_call.1} parent=1 // pred_fallthru
      _
    // Predicated region
    $region6: #{tpu_custom_call.1} parent=1 // pred_check
      _
    $region7: #{tpu_custom_call.1} parent=1 // pred_check_branch
      %22 = sbr.rel (0) target = $region9
    $region8: #{tpu_custom_call.1} parent=1 // pred_region
      %s24 = ssub.s32 3072, 3072
      %25 = vsyncadd [#allocation6], %s24
      %s26 = sshll.u32 [#allocation5], 4
      %s27 = int_to_ptr.vmem [resolvable:$true] %s26
      %32 = dma.hbm_to_vmem [thread:$0]  %s1, 3072, %s27, [#allocation6], 192, 192, 12
    $region9: #{tpu_custom_call.1} parent=1 // pred_fallthru
      _
    // Predicated region
    $region10: #{tpu_custom_call.1} parent=1 // pred_check
      _
    $region11: #{tpu_custom_call.1} parent=1 // pred_check_branch
      %34 = sbr.rel (0) target = $region13
    $region12: #{tpu_custom_call.1} parent=1 // pred_region
      _
    $region13: #{tpu_custom_call.1} parent=1 // pred_fallthru
      _
    // Predicated region
    $region14: #{tpu_custom_call.1} parent=1 // pred_check
      _
    $region15: #{tpu_custom_call.1} parent=1 // pred_check_branch
      %36 = sbr.rel (0) target = $region17
    $region16: #{tpu_custom_call.1} parent=1 // pred_region
      %37 = dma.done [#allocation3], 64
    $region17: #{tpu_custom_call.1} parent=1 // pred_fallthru
      _
    // Predicated region
    $region18: #{tpu_custom_call.1} parent=1 // pred_check
      _
    $region19: #{tpu_custom_call.1} parent=1 // pred_check_branch
      %39 = sbr.rel (0) target = $region21
    $region20: #{tpu_custom_call.1} parent=1 // pred_region
      %40 = dma.done [#allocation6], 3072
    $region21: #{tpu_custom_call.1} parent=1 // pred_fallthru
      _
    %v42 = vld [vmem:[#allocation2] sm:$0xf]
    %v43 = vld [vmem:[#allocation5] sm:$0xff]
    %v44 = vld [vmem:[#allocation5 + $0x8] sm:$0xf]
    %v45 = vld [vmem:[#allocation5 + $0xc] sm:$0xff]
    %v46 = vld [vmem:[#allocation5 + $0x14] sm:$0xf]
    %v47 = vld [vmem:[#allocation5 + $0x18] sm:$0xff]
    %v48 = vld [vmem:[#allocation5 + $0x20] sm:$0xf]
    %v49 = vld [vmem:[#allocation5 + $0x24] sm:$0xff]
    %v50 = vld [vmem:[#allocation5 + $0x2c] sm:$0xf]
    %v51 = vld [vmem:[#allocation5 + $0x30] sm:$0xff]
    %v52 = vld [vmem:[#allocation5 + $0x38] sm:$0xf]
    %v53 = vld [vmem:[#allocation5 + $0x3c] sm:$0xff]
    %v54 = vld [vmem:[#allocation5 + $0x44] sm:$0xf]
    %v55 = vld [vmem:[#allocation5 + $0x48] sm:$0xff]
    %v56 = vld [vmem:[#allocation5 + $0x50] sm:$0xf]
    %v57 = vld [vmem:[#allocation5 + $0x54] sm:$0xff]
    %v58 = vld [vmem:[#allocation5 + $0x5c] sm:$0xf]
    %v59 = vld [vmem:[#allocation5 + $0x60] sm:$0xff]
    %v60 = vld [vmem:[#allocation5 + $0x68] sm:$0xf]
    %v61 = vld [vmem:[#allocation5 + $0x6c] sm:$0xff]
    %v62 = vld [vmem:[#allocation5 + $0x74] sm:$0xf]
    %v63 = vld [vmem:[#allocation5 + $0x78] sm:$0xff]
    %v64 = vld [vmem:[#allocation5 + $0x80] sm:$0xf]
    %v65 = vld [vmem:[#allocation5 + $0x84] sm:$0xff]
    %v66 = vld [vmem:[#allocation5 + $0x8c] sm:$0xf]
    %v67 = vld [vmem:[#allocation5 + $0x90] sm:$0xff]
    %v68 = vld [vmem:[#allocation5 + $0x98] sm:$0xf]
    %v69 = vld [vmem:[#allocation5 + $0x9c] sm:$0xff]
    %v70 = vld [vmem:[#allocation5 + $0xa4] sm:$0xf]
    %v71 = vld [vmem:[#allocation5 + $0xa8] sm:$0xff]
    %v72 = vld [vmem:[#allocation5 + $0xb0] sm:$0xf]
    %v73 = vld [vmem:[#allocation5 + $0xb4] sm:$0xff]
    %v74 = vld [vmem:[#allocation5 + $0xbc] sm:$0xf]
    %v75 = vld [vmem:[%s2] sm:$0x7]
    %v77 = vlaneseq
    %v78 = vshrl.u32 %v77, 7
    %v79 = vsub.s32 0, %v78
    %v80 = vrot.slane %v75, %v79
    %v81 = vlaneseq
    %v82 = vshrl.u32 %v81, 7
    %v83 = vsub.s32 1, %v82
    %v84 = vrot.slane %v75, %v83
    %v85 = vlaneseq
    %v86 = vshrl.u32 %v85, 7
    %v87 = vsub.s32 2, %v86
    %v88 = vrot.slane %v75, %v87
    %v124 = vunpack.c.l.b16 %v43
    %v125 = vunpack.c.h.b16 %v43
    %v126 = vunpack.c.l.b16 %v44
    %v127 = vunpack.c.l.b16 %v45
    %v128 = vunpack.c.h.b16 %v45
    %v129 = vunpack.c.l.b16 %v46
    %v130 = vunpack.c.l.b16 %v47
    %v131 = vunpack.c.h.b16 %v47
    %v132 = vunpack.c.l.b16 %v48
    %v133 = vunpack.c.l.b16 %v49
    %v134 = vunpack.c.h.b16 %v49
    %v135 = vunpack.c.l.b16 %v50
    %v136 = vunpack.c.l.b16 %v51
    %v137 = vunpack.c.h.b16 %v51
    %v138 = vunpack.c.l.b16 %v52
    %v139 = vunpack.c.l.b16 %v53
    %v140 = vunpack.c.h.b16 %v53
    %v141 = vunpack.c.l.b16 %v54
    %v142 = vunpack.c.l.b16 %v55
    %v143 = vunpack.c.h.b16 %v55
    %v144 = vunpack.c.l.b16 %v56
    %v145 = vunpack.c.l.b16 %v57
    %v146 = vunpack.c.h.b16 %v57
    %v147 = vunpack.c.l.b16 %v58
    %v148 = vunpack.c.l.b16 %v59
    %v149 = vunpack.c.h.b16 %v59
    %v150 = vunpack.c.l.b16 %v60
    %v151 = vunpack.c.l.b16 %v61
    %v152 = vunpack.c.h.b16 %v61
    %v153 = vunpack.c.l.b16 %v62
    %v154 = vunpack.c.l.b16 %v63
    %v155 = vunpack.c.h.b16 %v63
    %v156 = vunpack.c.l.b16 %v64
    %v157 = vunpack.c.l.b16 %v65
    %v158 = vunpack.c.h.b16 %v65
    %v159 = vunpack.c.l.b16 %v66
    %v160 = vunpack.c.l.b16 %v67
    %v161 = vunpack.c.h.b16 %v67
    %v162 = vunpack.c.l.b16 %v68
    %v163 = vunpack.c.l.b16 %v69
    %v164 = vunpack.c.h.b16 %v69
    %v165 = vunpack.c.l.b16 %v70
    %v166 = vunpack.c.l.b16 %v71
    %v167 = vunpack.c.h.b16 %v71
    %v168 = vunpack.c.l.b16 %v72
    %v169 = vunpack.c.l.b16 %v73
    %v170 = vunpack.c.h.b16 %v73
    %v171 = vunpack.c.l.b16 %v74
    %v172 = vpack.c.b16 %v127, %v124
    %v173 = vpack.c.b16 %v128, %v125
    %v174 = vpack.c.b16 %v129, %v126
    %v175 = vpack.c.b16 %v133, %v130
    %v176 = vpack.c.b16 %v134, %v131
    %v177 = vpack.c.b16 %v135, %v132
    %v178 = vpack.c.b16 %v139, %v136
    %v179 = vpack.c.b16 %v140, %v137
    %v180 = vpack.c.b16 %v141, %v138
    %v181 = vpack.c.b16 %v145, %v142
    %v182 = vpack.c.b16 %v146, %v143
    %v183 = vpack.c.b16 %v147, %v144
    %v184 = vpack.c.b16 %v151, %v148
    %v185 = vpack.c.b16 %v152, %v149
    %v186 = vpack.c.b16 %v153, %v150
    %v187 = vpack.c.b16 %v157, %v154
    %v188 = vpack.c.b16 %v158, %v155
    %v189 = vpack.c.b16 %v159, %v156
    %v190 = vpack.c.b16 %v163, %v160
    %v191 = vpack.c.b16 %v164, %v161
    %v192 = vpack.c.b16 %v165, %v162
    %v193 = vpack.c.b16 %v169, %v166
    %v194 = vpack.c.b16 %v170, %v167
    %v195 = vpack.c.b16 %v171, %v168
    %220 = vmatprep.subr.bf16.mxu0 %v194
    %221 = vmatpush1.bf16.msra.mxu0 %v193
    %222 = vmatprep.subr.bf16.mxu0 %v191
    %223 = vmatpush1.bf16.msra.mxu0 %v190
    %224 = vmatprep.subr.bf16.mxu0 %v188
    %225 = vmatpush1.bf16.msra.mxu0 %v187
    %226 = vmatprep.subr.bf16.mxu0 %v185
    %227 = vmatpush1.bf16.msra.mxu0 %v184
    %228 = vmatprep.subr.bf16.mxu0 %v182
    %229 = vmatpush1.bf16.msra.mxu0 %v181
    %230 = vmatprep.subr.bf16.mxu0 %v179
    %231 = vmatpush1.bf16.msra.mxu0 %v178
    %232 = vmatprep.subr.bf16.mxu0 %v176
    %233 = vmatpush1.bf16.msra.mxu0 %v175
    %234 = vmatprep.subr.bf16.mxu0 %v173
    %235 = vmatpush1.bf16.msra.mxu0 %v172
    %236 = vmatprep.subr.bf16.mxu0 0
    %237 = vmatpush2.bf16.msra.mxu0 0
    %238 = vmatprep.subr.bf16.mxu0 0
    %239 = vmatpush2.bf16.msra.mxu0 0
    %240 = vmatprep.subr.bf16.mxu0 0
    %241 = vmatpush2.bf16.msra.mxu0 0
    %242 = vmatprep.subr.bf16.mxu0 0
    %243 = vmatpush2.bf16.msra.mxu0 0
    %244 = vmatprep.subr.bf16.mxu0 0
    %245 = vmatpush2.bf16.msra.mxu0 0
    %246 = vmatprep.subr.bf16.mxu0 0
    %247 = vmatpush2.bf16.msra.mxu0 0
    %248 = vmatprep.subr.bf16.mxu0 0
    %249 = vmatpush2.bf16.msra.mxu0 0
    %250 = vmatprep.subr.bf16.mxu0 0
    %251 = vmatpush2.bf16.msra.mxu0 0
    %252 = vmatprep.mubr.bf16.mxu0 0
    %253 = vmatmul.mubr.bf16.gmra.mxu0 %v42
    %v254 = vpop.f32.mrf.mxu0
    %v255 = vadd.f32 %v80, %v254
    %v256 = vpop.f32.mrf.mxu0
    %v257 = vadd.f32 %v84, %v256
    %v258 = vpop.f32.mrf.mxu0
    %v259 = vpop.f32.mrf.mxu0
    %260 = vdwg.mxu0
    %261 = vmatprep.subr.bf16.mxu0 0
    %262 = vmatpush1.bf16.msra.mxu0 %v195
    %263 = vmatprep.subr.bf16.mxu0 0
    %264 = vmatpush1.bf16.msra.mxu0 %v192
    %265 = vmatprep.subr.bf16.mxu0 0
    %266 = vmatpush1.bf16.msra.mxu0 %v189
    %267 = vmatprep.subr.bf16.mxu0 0
    %268 = vmatpush1.bf16.msra.mxu0 %v186
    %269 = vmatprep.subr.bf16.mxu0 0
    %270 = vmatpush1.bf16.msra.mxu0 %v183
    %271 = vmatprep.subr.bf16.mxu0 0
    %272 = vmatpush1.bf16.msra.mxu0 %v180
    %273 = vmatprep.subr.bf16.mxu0 0
    %274 = vmatpush1.bf16.msra.mxu0 %v177
    %275 = vmatprep.subr.bf16.mxu0 0
    %276 = vmatpush1.bf16.msra.mxu0 %v174
    %277 = vmatprep.subr.bf16.mxu0 0
    %278 = vmatpush2.bf16.msra.mxu0 0
    %279 = vmatprep.subr.bf16.mxu0 0
    %280 = vmatpush2.bf16.msra.mxu0 0
    %281 = vmatprep.subr.bf16.mxu0 0
    %282 = vmatpush2.bf16.msra.mxu0 0
    %283 = vmatprep.subr.bf16.mxu0 0
    %284 = vmatpush2.bf16.msra.mxu0 0
    %285 = vmatprep.subr.bf16.mxu0 0
    %286 = vmatpush2.bf16.msra.mxu0 0
    %287 = vmatprep.subr.bf16.mxu0 0
    %288 = vmatpush2.bf16.msra.mxu0 0
    %289 = vmatprep.subr.bf16.mxu0 0
    %290 = vmatpush2.bf16.msra.mxu0 0
    %291 = vmatprep.subr.bf16.mxu0 0
    %292 = vmatpush2.bf16.msra.mxu0 0
    %293 = vmatprep.mubr.bf16.mxu0 0
    %294 = vmatmul.mubr.bf16.gmra.mxu0 %v42
    %v295 = vpop.f32.mrf.mxu0
    %v296 = vadd.f32 %v88, %v295
    %v297 = vpop.f32.mrf.mxu0
    %v298 = vpop.f32.mrf.mxu0
    %v299 = vpop.f32.mrf.mxu0
    %300 = vdwg.mxu0
    %301 = vst [vmem:[#allocation7] sm:$0xff] %v255
    %302 = vst [vmem:[#allocation7 + $0x8] sm:$0xff] %v257
    %303 = vst [vmem:[#allocation7 + $0x10] sm:$0xff] %v296
    // Predicated region
    $region22: #{tpu_custom_call.1} parent=1 // pred_check
      _
    $region23: #{tpu_custom_call.1} parent=1 // pred_check_branch
      %305 = sbr.rel (0) target = $region25
    $region24: #{tpu_custom_call.1} parent=1 // pred_region
      %s307 = ssub.s32 384, 384
      %308 = vsyncadd [#allocation4], %s307
      %s310 = sshll.u32 [#allocation7], 4
      %s311 = int_to_ptr.vmem [resolvable:$true] %s310
      %313 = dma.vmem_to_hbm [thread:$0]  %s311, 384, %s3, [#allocation4]
    $region25: #{tpu_custom_call.1} parent=1 // pred_fallthru
      _
    // Predicated region
    $region26: #{tpu_custom_call.1} parent=1 // pred_check
      _
    $region27: #{tpu_custom_call.1} parent=1 // pred_check_branch
      %315 = sbr.rel (0) target = $region29
    $region28: #{tpu_custom_call.1} parent=1 // pred_region
      %316 = dma.done [#allocation4], 384
    $region29: #{tpu_custom_call.1} parent=1 // pred_fallthru
      _
    %317 = vsyncpa [#allocation3], 1
    %318 = vsyncpa [#allocation6], 1
    %319 = vsyncpa [#allocation4], 1

</llo_original>
